<compile_context>
chip_gen: v6e
topology: v6e:2x2x1
jax: 0.10.0
libtpu: 0.0.40
codegen_flags: <defaults>
</compile_context>

<pallas_src>
import functools
import math

import jax
import jax.numpy as jnp
import numpy as np
from jax.experimental import pallas as pl
from jax.experimental.pallas import tpu as pltpu

_EPS = 1e-5

# ---------------------------------------------------------------------------
# Generator architecture: (kind, C_in, C_out, K, stride, padding)
# ---------------------------------------------------------------------------
_ENCODER = [
    ("conv", 1, 48, 5, 2, 2),
    ("conv", 48, 128, 3, 1, 1),
    ("conv", 128, 128, 3, 1, 1),
    ("conv", 128, 128, 3, 2, 1),
    ("conv", 128, 256, 3, 1, 1),
    ("conv", 256, 256, 3, 1, 1),
    ("conv", 256, 256, 3, 2, 1),
    ("conv", 256, 512, 3, 1, 1),
    ("conv", 512, 1024, 3, 1, 1),
    ("conv", 1024, 1024, 3, 1, 1),
    ("conv", 1024, 1024, 3, 1, 1),
    ("conv", 1024, 1024, 3, 1, 1),
    ("conv", 1024, 512, 3, 1, 1),
    ("conv", 512, 256, 3, 1, 1),
]
_DECODER = [
    ("tconv", 256, 256, 4, 2, 1),
    ("conv", 256, 256, 3, 1, 1),
    ("conv", 256, 128, 3, 1, 1),
    ("tconv", 128, 128, 4, 2, 1),
    ("conv", 128, 128, 3, 1, 1),
    ("conv", 128, 48, 3, 1, 1),
    ("tconv", 48, 48, 4, 2, 1),
    ("conv", 48, 24, 3, 1, 1),
    ("conv_tanh", 24, 1, 3, 1, 1),   # Decoder.flat6 + Generator.tanh (no ReLU/BN)
]
_LAYERS = _ENCODER + _DECODER


# ---------------------------------------------------------------------------
# helpers
# ---------------------------------------------------------------------------
def _round_up(v, m):
    return (v + m - 1) // m * m


@functools.lru_cache(maxsize=None)
def _tpu_vmem_capacity():
    try:
        return int(pltpu.get_tpu_info().vmem_capacity_bytes)
    except Exception:                      # interpret mode / non-TPU / older jax
        return 64 * 1024 * 1024            # assume the most constrained (v7x-like)


def _vmem_limit_bytes():
    # 64 MiB scoped limit on 128-MiB-VMEM parts (v5e/v6e), 32 MiB on v7x-like parts.
    return (64 if _tpu_vmem_capacity() >= 128 * 1024 * 1024 else 32) * 1024 * 1024


def _dual_core_chip():
    # v7x: 2 TensorCores, 64 MiB VMEM.  v5e/v6e: 1 TC, 128 MiB.
    return _tpu_vmem_capacity() < 128 * 1024 * 1024


def _pick_tiles(mp, cp, kdp):
    """(TM, TN) for the matmul kernels: TM a multiple of 32 (bf16 sublane pack),
    TN lane-dense, working set (double-buffered) kept inside the VMEM budget."""
    budget = _vmem_limit_bytes() // 2
    tm = mp if mp <= 512 else 512
    while mp % tm:
        tm //= 2
    tn = 256 if cp % 256 == 0 else 128
    # dual-core parts: if the (serial) row axis has one step, give the parallel
    # column axis at least 2 steps per core by preferring TN=128.
    if _dual_core_chip() and mp // tm == 1 and cp // tn < 4 and cp >= 256:
        tn = 128

    def _ws(tm_, tn_):
        a = tm_ * kdp * 2            # bf16 patches tile
        w = kdp * tn_ * 2            # bf16 weight tile (resident across rows)
        y = tm_ * tn_ * 2            # bf16 output tile
        st = 2 * tn_ * 4             # stats row
        return 2 * (a + w + y + st)  # double buffering

    while _ws(tm, tn) > budget and tm > 32 and mp % (tm // 2) == 0:
        tm //= 2
    while _ws(tm, tn) > budget and tn > 128:
        tn //= 2
    return tm, tn


# ---------------------------------------------------------------------------
# Pallas kernels
# ---------------------------------------------------------------------------
def _matmul_bias_relu_stats_kernel(a_ref, w_ref, b_ref,            # inputs
                                   y_ref, psum_ref, psumsq_ref,    # outputs
                                   psum_acc, psumsq_acc,           # VMEM scratch
                                   *, m_valid, tm, mask_rows):
    # a_ref: (TM, Kd) bf16   w_ref: (Kd, TN) bf16   b_ref: (1, TN) f32
    # y_ref: (TM, TN) bf16   psum/psumsq: (1, TN) f32 (written once per column tile)
    i = pl.program_id(1)                       # inner row-tile axis ("arbitrary")
    acc = jnp.dot(a_ref[...], w_ref[...], preferred_element_type=jnp.float32)
    y = jnp.maximum(acc + b_ref[...], 0.0)     # bias + ReLU in f32
    y_ref[...] = y.astype(y_ref.dtype)         # bf16 store halves HBM traffic

    if mask_rows:  # static: only emitted when the last row tile contains padding
        rows = (jax.lax.broadcasted_iota(jnp.int32, (tm, 1), 0) + i * tm)
        y = jnp.where(rows < m_valid, y, 0.0)
    s = jnp.sum(y, axis=0, keepdims=True)      # stats from the f32 accumulator
    sq = jnp.sum(y * y, axis=0, keepdims=True)

    @pl.when(i == 0)
    def _():
        psum_acc[...] = jnp.zeros_like(psum_acc)
        psumsq_acc[...] = jnp.zeros_like(psumsq_acc)

    psum_acc[...] += s
    psumsq_acc[...] += sq

    @pl.when(i == pl.num_programs(1) - 1)
    def _():
        psum_ref[...] = psum_acc[...]
        psumsq_ref[...] = psumsq_acc[...]


def _matmul_bias_tanh_kernel(a_ref, w_ref, b_ref, y_ref):
    acc = jnp.dot(a_ref[...], w_ref[...], preferred_element_type=jnp.float32)
    y_ref[...] = jnp.tanh(acc + b_ref[...])


def _bn_scale_shift_kernel(y_ref, scale_ref, shift_ref, o_ref):
    # out = y * (gamma * invstd) + (beta - mean * gamma * invstd), bf16 in / bf16 out
    o_ref[...] = (y_ref[...].astype(jnp.float32) * scale_ref[...]
                  + shift_ref[...]).astype(o_ref.dtype)


# ---------------------------------------------------------------------------
# Pallas wrappers
# ---------------------------------------------------------------------------
def _pallas_conv_matmul(patches, w_mat, bias_row, *, m_valid, epilogue):
    """Fused im2col matmul: act(patches @ w + bias).  For 'relu_stats' it also
    emits per-column-tile channel sums / sums-of-squares so BN needs no extra
    HBM reduction pass."""
    mp, kdp = patches.shape
    _, cp = w_mat.shape
    tm, tn = _pick_tiles(mp, cp, kdp)
    # column tiles outer ("parallel"), row tiles inner ("arbitrary"): the weight
    # block stays resident across the whole inner loop.
    grid = (cp // tn, mp // tm)

    in_specs = [
        pl.BlockSpec((tm, kdp), lambda j, i: (i, 0)),
        pl.BlockSpec((kdp, tn), lambda j, i: (0, j)),
        pl.BlockSpec((1, tn), lambda j, i: (0, j)),
    ]
    if epilogue == "relu_stats":
        kernel = functools.partial(
            _matmul_bias_relu_stats_kernel,
            m_valid=m_valid, tm=tm, mask_rows=(m_valid < mp))
        out_shape = (
            jax.ShapeDtypeStruct((mp, cp), jnp.bfloat16),
            jax.ShapeDtypeStruct((1, cp), jnp.float32),
            jax.ShapeDtypeStruct((1, cp), jnp.float32),
        )
        out_specs = (
            pl.BlockSpec((tm, tn), lambda j, i: (i, j)),
            pl.BlockSpec((1, tn), lambda j, i: (0, j)),
            pl.BlockSpec((1, tn), lambda j, i: (0, j)),
        )
        scratch = [pltpu.VMEM((1, tn), jnp.float32),
                   pltpu.VMEM((1, tn), jnp.float32)]
    else:  # "tanh" (final layer, keep f32 output)
        kernel = _matmul_bias_tanh_kernel
        out_shape = jax.ShapeDtypeStruct((mp, cp), jnp.float32)
        out_specs = pl.BlockSpec((tm, tn), lambda j, i: (i, j))
        scratch = []

    return pl.pallas_call(
        kernel,
        out_shape=out_shape,
        grid_spec=pltpu.PrefetchScalarGridSpec(
            num_scalar_prefetch=0,
            grid=grid,
            in_specs=in_specs,
            out_specs=out_specs,
            scratch_shapes=scratch),
        compiler_params=pltpu.CompilerParams(
            dimension_semantics=("parallel", "arbitrary"),
            vmem_limit_bytes=_vmem_limit_bytes()),
    )(patches, w_mat, bias_row)


def _pallas_bn_affine(y2d, scale_row, shift_row):
    mp, cp = y2d.shape
    tm = mp if mp <= 1024 else 512
    while mp % tm:
        tm //= 2
    tn = 512 if cp % 512 == 0 else (256 if cp % 256 == 0 else 128)
    grid = (cp // tn, mp // tm)
    row_spec = pl.BlockSpec((1, tn), lambda j, i: (0, j))
    return pl.pallas_call(
        _bn_scale_shift_kernel,
        out_shape=jax.ShapeDtypeStruct((mp, cp), jnp.bfloat16),
        grid_spec=pltpu.PrefetchScalarGridSpec(
            num_scalar_prefetch=0,
            grid=grid,
            in_specs=[pl.BlockSpec((tm, tn), lambda j, i: (i, j)),
                      row_spec, row_spec],
            out_specs=pl.BlockSpec((tm, tn), lambda j, i: (i, j))),
        compiler_params=pltpu.CompilerParams(
            dimension_semantics=("parallel", "parallel"),
            vmem_limit_bytes=_vmem_limit_bytes()),
    )(y2d, scale_row, shift_row)


# ---------------------------------------------------------------------------
# conv lowering glue (XLA)
# ---------------------------------------------------------------------------
def _im2col_nhwc(x, k, stride, pad):
    # TODO(synk): gather the K*K shifted windows inside the matmul kernel via
    # manual DMA of overlapping row bands instead of materializing the
    # [M, K*K*Cin] slab in HBM; at these demo shapes the slab is tiny.
    n, h, w, c = x.shape
    ho = (h + 2 * pad - k) // stride + 1
    wo = (w + 2 * pad - k) // stride + 1
    xp = jnp.pad(x, ((0, 0), (pad, pad), (pad, pad), (0, 0)))
    cols = []
    for i in range(k):
        for j in range(k):
            cols.append(xp[:, i:i + (ho - 1) * stride + 1:stride,
                           j:j + (wo - 1) * stride + 1:stride, :])
    patches = jnp.stack(cols, axis=3)            # [N, Ho, Wo, K*K, C]
    return patches.reshape(n * ho * wo, k * k * c), ho, wo


def _tconv_subpixel_weight(w):
    """ConvTranspose2d(K=4, stride=2, pad=1) weight [Cin, Cout, 4, 4] ->
    dense [9*Cin, 4*Cout] matrix for a stride-1 3x3 im2col over the *input*,
    columns blocked as (phase_h, phase_w, Cout).  Row (n, q, j) of the matmul
    restricted to column block (rh, rw) equals output pixel (n, 2q+rh, 2j+rw).
    Only 4 of the 9 taps are non-zero per phase (36 vs 64 taps of the dilated
    lowering).  # TODO(synk): split into 4 separate 2x2 matmuls for the full 4x.
    """
    cin, cout = w.shape[0], w.shape[1]
    # tap index th reads x[q - 1 + th]; mapping phase/tap -> tconv kernel index.
    tap_to_k = ({0: 3, 1: 1}, {1: 2, 2: 0})
    zeros = jnp.zeros((cin, cout), w.dtype)
    tap_blocks = []
    for th in range(3):
        for tw in range(3):
            cols = []
            for rh in range(2):
                for rw in range(2):
                    kh = tap_to_k[rh].get(th)
                    kw = tap_to_k[rw].get(tw)
                    cols.append(zeros if (kh is None or kw is None)
                                else w[:, :, kh, kw])
            tap_blocks.append(jnp.concatenate(cols, axis=1))   # [Cin, 4*Cout]
    return jnp.concatenate(tap_blocks, axis=0)                 # [9*Cin, 4*Cout]


def _conv_layer(h_nhwc, p, cfg):
    """One block: conv -> +bias -> ReLU -> BatchNorm2d (batch statistics), or
    conv -> +bias -> tanh for the final layer.  NHWC in / NHWC out (bf16 between
    layers, f32 for the final tanh layer)."""
    kind, _cin, cout, k, stride, pad = cfg
    n = h_nhwc.shape[0]
    x = h_nhwc.astype(jnp.bfloat16)              # bf16 MXU inputs, f32 accumulate

    if kind == "tconv":
        # sub-pixel decomposition folded into one stride-1 3x3 im2col matmul with
        # phase-blocked output columns (no zero-dilated input slab).
        patches, ho, wo = _im2col_nhwc(x, 3, 1, 1)
        w_mat = _tconv_subpixel_weight(p["w"]).astype(jnp.bfloat16)
        n_cols = 4 * cout
        bias_full = jnp.tile(p["b"], 4)
    else:
        patches, ho, wo = _im2col_nhwc(x, k, stride, pad)
        # patches columns are (kh, kw, cin); match that in the weight matrix
        w_mat = p["w"].transpose(2, 3, 1, 0).reshape(-1, cout).astype(jnp.bfloat16)
        n_cols = cout
        bias_full = p["b"]

    m, kd = patches.shape
    mp = _round_up(m, 32)            # bf16 sublane pack only — no 128-row padding
    kdp = _round_up(kd, 128)
    cp = _round_up(n_cols, 128)
    patches = jnp.pad(patches, ((0, mp - m), (0, kdp - kd)))
    w_mat = jnp.pad(w_mat, ((0, kdp - kd), (0, cp - n_cols)))
    bias_row = jnp.pad(bias_full, (0, cp - n_cols)).reshape(1, cp).astype(jnp.float32)

    if kind == "conv_tanh":
        out2d = _pallas_conv_matmul(patches, w_mat, bias_row,
                                    m_valid=m, epilogue="tanh")
        return out2d[:m, :n_cols].reshape(n, ho, wo, cout)

    y2d, psum, psumsq = _pallas_conv_matmul(patches, w_mat, bias_row,
                                            m_valid=m, epilogue="relu_stats")
    if kind == "tconv":
        m_total = 4 * m                                   # all 4 output phases
        s = jnp.sum(psum[0, :n_cols].reshape(4, cout), axis=0)
        sq = jnp.sum(psumsq[0, :n_cols].reshape(4, cout), axis=0)
    else:
        m_total = m
        s, sq = psum[0, :cout], psumsq[0, :cout]

    mean = s / m_total
    var = jnp.maximum(sq / m_total - mean * mean, 0.0)    # biased, as PyTorch BN
    invstd = jax.lax.rsqrt(var + _EPS)
    scale_ch = p["gamma"] * invstd
    shift_ch = p["beta"] - mean * scale_ch
    if kind == "tconv":
        scale_col, shift_col = jnp.tile(scale_ch, 4), jnp.tile(shift_ch, 4)
    else:
        scale_col, shift_col = scale_ch, shift_ch
    scale_row = jnp.pad(scale_col, (0, cp - n_cols)).reshape(1, cp).astype(jnp.float32)
    shift_row = jnp.pad(shift_col, (0, cp - n_cols)).reshape(1, cp).astype(jnp.float32)

    out2d = _pallas_bn_affine(y2d, scale_row, shift_row)[:m, :n_cols]

    if kind == "tconv":
        out = out2d.reshape(n, ho, wo, 2, 2, cout)        # (rh, rw) phase blocks
        out = out.transpose(0, 1, 3, 2, 4, 5).reshape(n, 2 * ho, 2 * wo, cout)
        return out
    return out2d.reshape(n, ho, wo, cout)


@jax.jit
def generator_forward(x_nchw, params):
    """Encoder -> Decoder -> tanh, matching the PyTorch Generator forward
    (training-mode BatchNorm, i.e. batch statistics).  NCHW in / NCHW out."""
    h = jnp.transpose(x_nchw, (0, 2, 3, 1))               # NHWC internally
    for cfg, p in zip(_LAYERS, params):
        h = _conv_layer(h, p, cfg)
    return jnp.transpose(h, (0, 3, 1, 2))


# ---------------------------------------------------------------------------
# parameters
# ---------------------------------------------------------------------------
def _init_layer_params(key, cfg):
    kind, cin, cout, k, _stride, _pad = cfg
    kw_, kb, kg, kbe = jax.random.split(key, 4)
    fan_in = cin * k * k
    if kind == "tconv":
        w = jax.random.normal(kw_, (cin, cout, k, k), jnp.float32)
    else:
        w = jax.random.normal(kw_, (cout, cin, k, k), jnp.float32)
    p = {"w": w / math.sqrt(fan_in),
         "b": 0.1 * jax.random.normal(kb, (cout,), jnp.float32)}
    if kind != "conv_tanh":
        p["gamma"] = 1.0 + 0.1 * jax.random.normal(kg, (cout,), jnp.float32)
        p["beta"] = 0.1 * jax.random.normal(kbe, (cout,), jnp.float32)
    return p


def init_params(key):
    keys = jax.random.split(key, len(_LAYERS))
    return [_init_layer_params(kk, cfg) for kk, cfg in zip(keys, _LAYERS)]


# ---------------------------------------------------------------------------
# Pure-JAX per-block reference (lax.conv, same bf16 quantization points).
# NOTE: the full 23-layer net is NOT asserted end-to-end on purpose — training-mode
# BN + ReLU with random weights amplifies ~1e-6 accumulation-order differences
# chaotically across layers; per-block checks are tight and cover every code path.
# ---------------------------------------------------------------------------
def _reference_block(h_nhwc, p, cfg):
    kind, _cin, cout, k, stride, pad = cfg
    x = h_nhwc.astype(jnp.bfloat16)
    if kind == "tconv":
        # transposed conv == dilate by stride, pad K-1-p, conv with the flipped
        # kernel (in/out channels swapped)
        w_hwio = jnp.flip(p["w"], axis=(2, 3)).transpose(2, 3, 0, 1)
        y = jax.lax.conv_general_dilated(
            x, w_hwio.astype(jnp.bfloat16), window_strides=(1, 1),
            padding=[(k - 1 - pad,) * 2] * 2, lhs_dilation=(stride, stride),
            dimension_numbers=("NHWC", "HWIO", "NHWC"),
            preferred_element_type=jnp.float32)
    else:
        w_hwio = p["w"].transpose(2, 3, 1, 0)
        y = jax.lax.conv_general_dilated(
            x, w_hwio.astype(jnp.bfloat16), window_strides=(stride, stride),
            padding=[(pad, pad)] * 2,
            dimension_numbers=("NHWC", "HWIO", "NHWC"),
            preferred_element_type=jnp.float32)
    y = y + p["b"].reshape(1, 1, 1, cout)
    if kind == "conv_tanh":
        return jnp.tanh(y)
    y = jnp.maximum(y, 0.0)
    mean = jnp.mean(y, axis=(0, 1, 2))
    var = jnp.maximum(jnp.mean(y * y, axis=(0, 1, 2)) - mean * mean, 0.0)
    scale = p["gamma"] * jax.lax.rsqrt(var + _EPS)
    shift = p["beta"] - mean * scale
    yq = y.astype(jnp.bfloat16).astype(jnp.float32)   # kernel stores y in bf16
    return (yq * scale + shift).astype(jnp.bfloat16)


if __name__ == "__main__":
    key = jax.random.PRNGKey(0)

    # ---- per-block correctness checks (every layer kind / epilogue / mask path)
    test_cases = [
        (("conv", 1, 48, 5, 2, 2), (2, 16, 16, 1)),      # 5x5 stride-2 encoder stem
        (("conv", 1, 48, 5, 2, 2), (3, 6, 6, 1)),        # M=27 -> exercises row masking
        (("conv", 48, 128, 3, 1, 1), (2, 8, 8, 48)),     # 3x3 stride-1
        (("conv", 128, 128, 3, 2, 1), (2, 8, 8, 128)),   # 3x3 stride-2
        (("tconv", 48, 48, 4, 2, 1), (2, 8, 8, 48)),     # sub-pixel transposed conv
        (("conv_tanh", 24, 1, 3, 1, 1), (2, 16, 16, 24)),
    ]
    for idx, (cfg, shape) in enumerate(test_cases):
        key, kx, kp = jax.random.split(key, 3)
        h = jax.random.normal(kx, shape, jnp.float32)
        p = _init_layer_params(kp, cfg)
        got = jax.block_until_ready(_conv_layer(h, p, cfg))
        want = jax.block_until_ready(_reference_block(h, p, cfg))
        np.testing.assert_allclose(
            np.asarray(got, np.float32), np.asarray(want, np.float32),
            rtol=5e-2, atol=5e-2, err_msg=f"block check {idx} failed: {cfg}")

    # ---- full Generator forward (32x32 keeps the bottleneck at a non-degenerate 4x4)
    key, kx, kp = jax.random.split(key, 3)
    x = jax.random.normal(kx, (2, 1, 32, 32), dtype=jnp.float32)
    params = init_params(kp)
    out = jax.block_until_ready(generator_forward(x, params))
    assert out.shape == (2, 1, 32, 32), out.shape
    assert bool(jnp.all(jnp.isfinite(out))), "non-finite values in Generator output"

    print("KERNEL_OK")
</pallas_src>

<mosaic_0001>
module attributes {stable_mosaic.version = 11 : i64} {
  func.func @_matmul_bias_relu_stats_kernel(%arg0: i32, %arg1: i32, %arg2: memref<128x128xbf16, #tpu.memory_space<vmem>>, %arg3: memref<128x128xbf16, #tpu.memory_space<vmem>>, %arg4: memref<1x128xf32, #tpu.memory_space<vmem>>, %arg5: memref<128x128xbf16, #tpu.memory_space<vmem>>, %arg6: memref<1x128xf32, #tpu.memory_space<vmem>>, %arg7: memref<1x128xf32, #tpu.memory_space<vmem>>, %arg8: memref<1x128xf32, #tpu.memory_space<vmem>>, %arg9: memref<1x128xf32, #tpu.memory_space<vmem>>) attributes {dimension_semantics = [#tpu.dimension_semantics<parallel>, #tpu.dimension_semantics<arbitrary>], iteration_bounds = array<i64: 1, 1>, scalar_prefetch = 0 : i64, scratch_operands = 2 : i64, tpu.core_type = #tpu.core_type<tc>, window_params = [{transform_indices = @transform_0, window_bounds = array<i64: 128, 128>}, {transform_indices = @transform_1, window_bounds = array<i64: 128, 128>}, {transform_indices = @transform_2, window_bounds = array<i64: 1, 128>}, {transform_indices = @transform_3, window_bounds = array<i64: 128, 128>}, {transform_indices = @transform_4, window_bounds = array<i64: 1, 128>}, {transform_indices = @transform_5, window_bounds = array<i64: 1, 128>}]} {
    %c0 = arith.constant 0 : index
    %c0_0 = arith.constant 0 : index
    %0 = vector.load %arg2[%c0, %c0_0] : memref<128x128xbf16, #tpu.memory_space<vmem>>, vector<128x128xbf16>
    %c0_1 = arith.constant 0 : index
    %c0_2 = arith.constant 0 : index
    %1 = vector.load %arg3[%c0_1, %c0_2] : memref<128x128xbf16, #tpu.memory_space<vmem>>, vector<128x128xbf16>
    %cst = arith.constant dense<0.000000e+00> : vector<128x128xf32>
    %2 = tpu.matmul %0, %1, %cst {dimension_numbers = #tpu.dot_dimension_numbers<[1], [0], [0], [1], [0, 0, 1, 1], [], []>} : vector<128x128xbf16>, vector<128x128xbf16>, vector<128x128xf32> -> vector<128x128xf32>
    %c0_3 = arith.constant 0 : index
    %c0_4 = arith.constant 0 : index
    %3 = vector.load %arg4[%c0_3, %c0_4] : memref<1x128xf32, #tpu.memory_space<vmem>>, vector<1x128xf32>
    %4 = vector.broadcast %3 : vector<1x128xf32> to vector<128x128xf32>
    %5 = arith.addf %2, %4 : vector<128x128xf32>
    %cst_5 = arith.constant 0.000000e+00 : f32
    %6 = vector.broadcast %cst_5 : f32 to vector<128x128xf32>
    %7 = arith.maximumf %5, %6 : vector<128x128xf32>
    %8 = arith.truncf %7 : vector<128x128xf32> to vector<128x128xbf16>
    %c0_6 = arith.constant 0 : index
    %c0_7 = arith.constant 0 : index
    %9 = vector.load %arg5[%c0_6, %c0_7] : memref<128x128xbf16, #tpu.memory_space<vmem>>, vector<128x128xbf16>
    tpu.vector_store %arg5[%c0_6, %c0_7], %8 {strides = array<i32>} : memref<128x128xbf16, #tpu.memory_space<vmem>>, vector<128x128xbf16>,
    %cst_8 = arith.constant dense<0.000000e+00> : vector<128xf32>
    %10 = vector.multi_reduction <add>, %7, %cst_8 [0] : vector<128x128xf32> to vector<128xf32>
    %11 = vector.shape_cast %10 : vector<128xf32> to vector<1x128xf32>
    %12 = arith.mulf %7, %7 : vector<128x128xf32>
    %cst_9 = arith.constant dense<0.000000e+00> : vector<128xf32>
    %13 = vector.multi_reduction <add>, %12, %cst_9 [0] : vector<128x128xf32> to vector<128xf32>
    %14 = vector.shape_cast %13 : vector<128xf32> to vector<1x128xf32>
    %c0_i32 = arith.constant 0 : i32
    %15 = arith.cmpi eq, %arg1, %c0_i32 : i32
    %16 = arith.extui %15 : i1 to i32
    %c0_i32_10 = arith.constant 0 : i32
    %17 = arith.cmpi ne, %16, %c0_i32_10 : i32
    scf.if %17 {
      %cst_21 = arith.constant 0.000000e+00 : f32
      %27 = vector.broadcast %cst_21 : f32 to vector<1x128xf32>
      %c0_22 = arith.constant 0 : index
      %c0_23 = arith.constant 0 : index
      %28 = vector.load %arg8[%c0_22, %c0_23] : memref<1x128xf32, #tpu.memory_space<vmem>>, vector<1x128xf32>
      tpu.vector_store %arg8[%c0_22, %c0_23], %27 {strides = array<i32>} : memref<1x128xf32, #tpu.memory_space<vmem>>, vector<1x128xf32>,
      %cst_24 = arith.constant 0.000000e+00 : f32
      %29 = vector.broadcast %cst_24 : f32 to vector<1x128xf32>
      %c0_25 = arith.constant 0 : index
      %c0_26 = arith.constant 0 : index
      %30 = vector.load %arg9[%c0_25, %c0_26] : memref<1x128xf32, #tpu.memory_space<vmem>>, vector<1x128xf32>
      tpu.vector_store %arg9[%c0_25, %c0_26], %29 {strides = array<i32>} : memref<1x128xf32, #tpu.memory_space<vmem>>, vector<1x128xf32>,
    } else {
    }
    %c0_11 = arith.constant 0 : index
    %c0_12 = arith.constant 0 : index
    %18 = vector.load %arg8[%c0_11, %c0_12] : memref<1x128xf32, #tpu.memory_space<vmem>>, vector<1x128xf32>
    %19 = arith.addf %18, %11 : vector<1x128xf32>
    %c0_13 = arith.constant 0 : index
    %c0_14 = arith.constant 0 : index
    %20 = vector.load %arg8[%c0_13, %c0_14] : memref<1x128xf32, #tpu.memory_space<vmem>>, vector<1x128xf32>
    tpu.vector_store %arg8[%c0_13, %c0_14], %19 {strides = array<i32>} : memref<1x128xf32, #tpu.memory_space<vmem>>, vector<1x128xf32>,
    %c0_15 = arith.constant 0 : index
    %c0_16 = arith.constant 0 : index
    %21 = vector.load %arg9[%c0_15, %c0_16] : memref<1x128xf32, #tpu.memory_space<vmem>>, vector<1x128xf32>
    %22 = arith.addf %21, %14 : vector<1x128xf32>
    %c0_17 = arith.constant 0 : index
    %c0_18 = arith.constant 0 : index
    %23 = vector.load %arg9[%c0_17, %c0_18] : memref<1x128xf32, #tpu.memory_space<vmem>>, vector<1x128xf32>
    tpu.vector_store %arg9[%c0_17, %c0_18], %22 {strides = array<i32>} : memref<1x128xf32, #tpu.memory_space<vmem>>, vector<1x128xf32>,
    %c0_i32_19 = arith.constant 0 : i32
    %24 = arith.cmpi eq, %arg1, %c0_i32_19 : i32
    %25 = arith.extui %24 : i1 to i32
    %c0_i32_20 = arith.constant 0 : i32
    %26 = arith.cmpi ne, %25, %c0_i32_20 : i32
    scf.if %26 {
      %c0_21 = arith.constant 0 : index
      %c0_22 = arith.constant 0 : index
      %27 = vector.load %arg8[%c0_21, %c0_22] : memref<1x128xf32, #tpu.memory_space<vmem>>, vector<1x128xf32>
      %c0_23 = arith.constant 0 : index
      %c0_24 = arith.constant 0 : index
      %28 = vector.load %arg6[%c0_23, %c0_24] : memref<1x128xf32, #tpu.memory_space<vmem>>, vector<1x128xf32>
      tpu.vector_store %arg6[%c0_23, %c0_24], %27 {strides = array<i32>} : memref<1x128xf32, #tpu.memory_space<vmem>>, vector<1x128xf32>,
      %c0_25 = arith.constant 0 : index
      %c0_26 = arith.constant 0 : index
      %29 = vector.load %arg9[%c0_25, %c0_26] : memref<1x128xf32, #tpu.memory_space<vmem>>, vector<1x128xf32>
      %c0_27 = arith.constant 0 : index
      %c0_28 = arith.constant 0 : index
      %30 = vector.load %arg7[%c0_27, %c0_28] : memref<1x128xf32, #tpu.memory_space<vmem>>, vector<1x128xf32>
      tpu.vector_store %arg7[%c0_27, %c0_28], %29 {strides = array<i32>} : memref<1x128xf32, #tpu.memory_space<vmem>>, vector<1x128xf32>,
    } else {
    }
    return
  }
  func.func @transform_0(%arg0: i32, %arg1: i32) -> (i32, i32) {
    %c0_i32 = arith.constant 0 : i32
    %c0_i32_0 = arith.constant 0 : i32
    return %arg1, %c0_i32 : i32, i32
  }
  func.func @transform_1(%arg0: i32, %arg1: i32) -> (i32, i32) {
    %c0_i32 = arith.constant 0 : i32
    %c0_i32_0 = arith.constant 0 : i32
    return %c0_i32, %arg0 : i32, i32
  }
  func.func @transform_2(%arg0: i32, %arg1: i32) -> (i32, i32) {
    %c0_i32 = arith.constant 0 : i32
    %c0_i32_0 = arith.constant 0 : i32
    return %c0_i32, %arg0 : i32, i32
  }
  func.func @transform_3(%arg0: i32, %arg1: i32) -> (i32, i32) {
    %c0_i32 = arith.constant 0 : i32
    return %arg1, %arg0 : i32, i32
  }
  func.func @transform_4(%arg0: i32, %arg1: i32) -> (i32, i32) {
    %c0_i32 = arith.constant 0 : i32
    %c0_i32_0 = arith.constant 0 : i32
    return %c0_i32, %arg0 : i32, i32
  }
  func.func @transform_5(%arg0: i32, %arg1: i32) -> (i32, i32) {
    %c0_i32 = arith.constant 0 : i32
    %c0_i32_0 = arith.constant 0 : i32
    return %c0_i32, %arg0 : i32, i32
  }
}

</mosaic_0001>

<llo_original>
// kernel: tpu_custom_call.1
$region0: #{tpu_custom_call.1}
  #allocation0 [shape = 'u32[]', space=smem, size = 0x4, offset = 0x4, fixed_abs, tag = 'smem constant byte address 0x4 - core index']
  #allocation1 [shape = 'u32[144,128]{1,0:T(1,128)}', space=vmem, size = 0x12000, scoped, tag = 'internal scratch']
  #allocation2 [shape = 'f32[1,128]{1,0:T(1,128)}', space=vmem, size = 0x200, scoped, tag = 'scratch operand']
  #allocation3 [shape = 'f32[1,128]{1,0:T(1,128)}', space=vmem, size = 0x200, scoped, tag = 'scratch operand']
  %s0 = inlined_call_operand.hbm [shape: bf16[128,128], index: 0, kind: input, shape index: {}]
  %s1 = inlined_call_operand.hbm [shape: bf16[128,128], index: 1, kind: input, shape index: {}]
  %s2 = inlined_call_operand.vmem [shape: f32[1,128], index: 2, kind: input, shape index: {}]
  %s3 = inlined_call_operand.hbm [shape: bf16[128,128], index: 3, kind: output, shape index: {0}]
  %s4 = inlined_call_operand.hbm [shape: f32[1,128], index: 4, kind: output, shape index: {1}]
  %s5 = inlined_call_operand.hbm [shape: f32[1,128], index: 5, kind: output, shape index: {2}]
  %6 = xla_tuple %s3, %s4, %s5
  %s7 = sld [smem:[#allocation0]]
  $region54: #{tpu_custom_call.1} parent=0
    _
  %s9 = ssub.s32 1, %s7
  %s10 = scalar_select 0, %s9, %s7
  $region1: #{tpu_custom_call.1} parent=0
    #allocation4 [shape = 'u8[32768]{0}', space=vmem, size = 0x8000, scoped, tag = 'input window, operand 0, single buffered']
    #allocation5 [shape = 's32[1]{0}', space=sflag, size = 0x4, scoped, tag = 'scoped memory for tpu_custom_call.1']
    #allocation6 [shape = 's32[1]{0}', space=sflag, size = 0x4, scoped, tag = 'scoped memory for tpu_custom_call.1']
    #allocation7 [shape = 'u8[32768]{0}', space=vmem, size = 0x8000, scoped, tag = 'input window, operand 1, single buffered']
    #allocation8 [shape = 's32[1]{0}', space=sflag, size = 0x4, scoped, tag = 'scoped memory for tpu_custom_call.1']
    #allocation9 [shape = 'u8[32768]{0}', space=vmem, size = 0x8000, scoped, tag = 'output window, operand 0, single buffered']
    #allocation10 [shape = 'u8[512]{0}', space=vmem, size = 0x400, scoped, tag = 'output window, operand 1, single buffered']
    #allocation11 [shape = 's32[1]{0}', space=sflag, size = 0x4, scoped, tag = 'scoped memory for tpu_custom_call.1']
    #allocation12 [shape = 'u8[512]{0}', space=vmem, size = 0x400, scoped, tag = 'output window, operand 2, single buffered']
    %11 = vsyncpa [#allocation5], 0
    %12 = vsyncpa [#allocation8], 0
    %13 = vsyncpa [#allocation6], 0
    %14 = vsyncpa [#allocation11], 0
    // Predicated region
    $region2: #{tpu_custom_call.1} parent=1 // pred_check
      _
    $region3: #{tpu_custom_call.1} parent=1 // pred_check_branch
      %16 = sbr.rel (0) target = $region5
    $region4: #{tpu_custom_call.1} parent=1 // pred_region
      %s18 = ssub.s32 1024, 1024
      %19 = vsyncadd [#allocation5], %s18
      %s20 = sshll.u32 [#allocation4], 4
      %s21 = int_to_ptr.vmem [resolvable:$true] %s20
      %26 = dma.hbm_to_vmem [thread:$0]  %s0, 1024, %s21, [#allocation5], 64, 64, 4
    $region5: #{tpu_custom_call.1} parent=1 // pred_fallthru
      _
    // Predicated region
    $region6: #{tpu_custom_call.1} parent=1 // pred_check
      _
    $region7: #{tpu_custom_call.1} parent=1 // pred_check_branch
      %28 = sbr.rel (0) target = $region9
    $region8: #{tpu_custom_call.1} parent=1 // pred_region
      %s30 = ssub.s32 1024, 1024
      %31 = vsyncadd [#allocation8], %s30
      %s32 = sshll.u32 [#allocation7], 4
      %s33 = int_to_ptr.vmem [resolvable:$true] %s32
      %38 = dma.hbm_to_vmem [thread:$0]  %s1, 1024, %s33, [#allocation8], 64, 64, 4
    $region9: #{tpu_custom_call.1} parent=1 // pred_fallthru
      _
    // Predicated region
    $region10: #{tpu_custom_call.1} parent=1 // pred_check
      _
    $region11: #{tpu_custom_call.1} parent=1 // pred_check_branch
      %40 = sbr.rel (0) target = $region13
    $region12: #{tpu_custom_call.1} parent=1 // pred_region
      _
    $region13: #{tpu_custom_call.1} parent=1 // pred_fallthru
      _
    // Predicated region
    $region14: #{tpu_custom_call.1} parent=1 // pred_check
      _
    $region15: #{tpu_custom_call.1} parent=1 // pred_check_branch
      %42 = sbr.rel (0) target = $region17
    $region16: #{tpu_custom_call.1} parent=1 // pred_region
      %43 = dma.done [#allocation5], 1024
    $region17: #{tpu_custom_call.1} parent=1 // pred_fallthru
      _
    // Predicated region
    $region18: #{tpu_custom_call.1} parent=1 // pred_check
      _
    $region19: #{tpu_custom_call.1} parent=1 // pred_check_branch
      %45 = sbr.rel (0) target = $region21
    $region20: #{tpu_custom_call.1} parent=1 // pred_region
      %46 = dma.done [#allocation8], 1024
    $region21: #{tpu_custom_call.1} parent=1 // pred_fallthru
      _
    %v48 = vld [vmem:[#allocation4] sm:$0xf]
    %v49 = vld [vmem:[#allocation4 + $0x4] sm:$0xf]
    %v50 = vld [vmem:[#allocation4 + $0x8] sm:$0xf]
    %v51 = vld [vmem:[#allocation4 + $0xc] sm:$0xf]
    %v52 = vld [vmem:[#allocation4 + $0x10] sm:$0xf]
    %v53 = vld [vmem:[#allocation4 + $0x14] sm:$0xf]
    %v54 = vld [vmem:[#allocation4 + $0x18] sm:$0xf]
    %v55 = vld [vmem:[#allocation4 + $0x1c] sm:$0xf]
    %v56 = vld [vmem:[#allocation4 + $0x20] sm:$0xf]
    %v57 = vld [vmem:[#allocation4 + $0x24] sm:$0xf]
    %v58 = vld [vmem:[#allocation4 + $0x28] sm:$0xf]
    %v59 = vld [vmem:[#allocation4 + $0x2c] sm:$0xf]
    %v60 = vld [vmem:[#allocation4 + $0x30] sm:$0xf]
    %v61 = vld [vmem:[#allocation4 + $0x34] sm:$0xf]
    %v62 = vld [vmem:[#allocation4 + $0x38] sm:$0xf]
    %v63 = vld [vmem:[#allocation4 + $0x3c] sm:$0xf]
    %v64 = vld [vmem:[#allocation7] sm:$0xf]
    %v65 = vld [vmem:[#allocation7 + $0x4] sm:$0xf]
    %v66 = vld [vmem:[#allocation7 + $0x8] sm:$0xf]
    %v67 = vld [vmem:[#allocation7 + $0xc] sm:$0xf]
    %v68 = vld [vmem:[#allocation7 + $0x10] sm:$0xf]
    %v69 = vld [vmem:[#allocation7 + $0x14] sm:$0xf]
    %v70 = vld [vmem:[#allocation7 + $0x18] sm:$0xf]
    %v71 = vld [vmem:[#allocation7 + $0x1c] sm:$0xf]
    %v72 = vld [vmem:[#allocation7 + $0x20] sm:$0xf]
    %v73 = vld [vmem:[#allocation7 + $0x24] sm:$0xf]
    %v74 = vld [vmem:[#allocation7 + $0x28] sm:$0xf]
    %v75 = vld [vmem:[#allocation7 + $0x2c] sm:$0xf]
    %v76 = vld [vmem:[#allocation7 + $0x30] sm:$0xf]
    %v77 = vld [vmem:[#allocation7 + $0x34] sm:$0xf]
    %v78 = vld [vmem:[#allocation7 + $0x38] sm:$0xf]
    %v79 = vld [vmem:[#allocation7 + $0x3c] sm:$0xf]
    %v80 = vld [vmem:[%s2] sm:$0x1]
    %v82 = vlaneseq
    %v83 = vshrl.u32 %v82, 7
    %v84 = vsub.s32 0, %v83
    %v85 = vrot.slane %v80, %v84
    %v103 = vunpack.c.l.b16 %v48
    %v104 = vunpack.c.l.b16 %v49
    %v105 = vunpack.c.l.b16 %v50
    %v106 = vunpack.c.l.b16 %v51
    %v107 = vunpack.c.l.b16 %v52
    %v108 = vunpack.c.l.b16 %v53
    %v109 = vunpack.c.l.b16 %v54
    %v110 = vunpack.c.l.b16 %v55
    %v111 = vunpack.c.l.b16 %v56
    %v112 = vunpack.c.l.b16 %v57
    %v113 = vunpack.c.l.b16 %v58
    %v114 = vunpack.c.l.b16 %v59
    %v115 = vunpack.c.l.b16 %v60
    %v116 = vunpack.c.l.b16 %v61
    %v117 = vunpack.c.l.b16 %v62
    %v118 = vunpack.c.l.b16 %v63
    %v119 = vpack.c.b16 %v104, %v103
    %v120 = vpack.c.b16 %v106, %v105
    %v121 = vpack.c.b16 %v108, %v107
    %v122 = vpack.c.b16 %v110, %v109
    %v123 = vpack.c.b16 %v112, %v111
    %v124 = vpack.c.b16 %v114, %v113
    %v125 = vpack.c.b16 %v116, %v115
    %v126 = vpack.c.b16 %v118, %v117
    %v151 = vunpack.c.l.b16 %v64
    %v152 = vunpack.c.l.b16 %v65
    %v153 = vunpack.c.l.b16 %v66
    %v154 = vunpack.c.l.b16 %v67
    %v155 = vunpack.c.l.b16 %v68
    %v156 = vunpack.c.l.b16 %v69
    %v157 = vunpack.c.l.b16 %v70
    %v158 = vunpack.c.l.b16 %v71
    %v159 = vunpack.c.l.b16 %v72
    %v160 = vunpack.c.l.b16 %v73
    %v161 = vunpack.c.l.b16 %v74
    %v162 = vunpack.c.l.b16 %v75
    %v163 = vunpack.c.l.b16 %v76
    %v164 = vunpack.c.l.b16 %v77
    %v165 = vunpack.c.l.b16 %v78
    %v166 = vunpack.c.l.b16 %v79
    %v167 = vpack.c.b16 %v152, %v151
    %v168 = vpack.c.b16 %v154, %v153
    %v169 = vpack.c.b16 %v156, %v155
    %v170 = vpack.c.b16 %v158, %v157
    %v171 = vpack.c.b16 %v160, %v159
    %v172 = vpack.c.b16 %v162, %v161
    %v173 = vpack.c.b16 %v164, %v163
    %v174 = vpack.c.b16 %v166, %v165
    %183 = vmatprep.subr.bf16.mxu0 0
    %184 = vmatpush1.bf16.msra.mxu0 %v174
    %185 = vmatprep.subr.bf16.mxu0 0
    %186 = vmatpush1.bf16.msra.mxu0 %v173
    %187 = vmatprep.subr.bf16.mxu0 0
    %188 = vmatpush1.bf16.msra.mxu0 %v172
    %189 = vmatprep.subr.bf16.mxu0 0
    %190 = vmatpush1.bf16.msra.mxu0 %v171
    %191 = vmatprep.subr.bf16.mxu0 0
    %192 = vmatpush1.bf16.msra.mxu0 %v170
    %193 = vmatprep.subr.bf16.mxu0 0
    %194 = vmatpush1.bf16.msra.mxu0 %v169
    %195 = vmatprep.subr.bf16.mxu0 0
    %196 = vmatpush1.bf16.msra.mxu0 %v168
    %197 = vmatprep.subr.bf16.mxu0 0
    %198 = vmatpush1.bf16.msra.mxu0 %v167
    %199 = vmatprep.subr.bf16.mxu0 0
    %200 = vmatpush2.bf16.msra.mxu0 0
    %201 = vmatprep.subr.bf16.mxu0 0
    %202 = vmatpush2.bf16.msra.mxu0 0
    %203 = vmatprep.subr.bf16.mxu0 0
    %204 = vmatpush2.bf16.msra.mxu0 0
    %205 = vmatprep.subr.bf16.mxu0 0
    %206 = vmatpush2.bf16.msra.mxu0 0
    %207 = vmatprep.subr.bf16.mxu0 0
    %208 = vmatpush2.bf16.msra.mxu0 0
    %209 = vmatprep.subr.bf16.mxu0 0
    %210 = vmatpush2.bf16.msra.mxu0 0
    %211 = vmatprep.subr.bf16.mxu0 0
    %212 = vmatpush2.bf16.msra.mxu0 0
    %213 = vmatprep.subr.bf16.mxu0 0
    %214 = vmatpush2.bf16.msra.mxu0 0
    %215 = vmatprep.mubr.bf16.mxu0 0
    %216 = vmatmul.mubr.bf16.gmra.mxu0 %v119
    %v217 = vpop.f32.mrf.mxu0
    %v218 = vadd.f32 %v85, %v217
    %v219 = vpop.f32.mrf.mxu0
    %v220 = vpop.f32.mrf.mxu0
    %v221 = vadd.f32 %v85, %v220
    %v222 = vpop.f32.mrf.mxu0
    %223 = vmatprep.mubr.bf16.mxu0 0
    %224 = vmatmul.mubr.bf16.gmra.mxu0 %v120
    %v225 = vpop.f32.mrf.mxu0
    %v226 = vadd.f32 %v85, %v225
    %v227 = vpop.f32.mrf.mxu0
    %v228 = vpop.f32.mrf.mxu0
    %v229 = vadd.f32 %v85, %v228
    %v230 = vpop.f32.mrf.mxu0
    %231 = vmatprep.mubr.bf16.mxu0 0
    %232 = vmatmul.mubr.bf16.gmra.mxu0 %v121
    %v233 = vpop.f32.mrf.mxu0
    %v234 = vadd.f32 %v85, %v233
    %v235 = vpop.f32.mrf.mxu0
    %v236 = vpop.f32.mrf.mxu0
    %v237 = vadd.f32 %v85, %v236
    %v238 = vpop.f32.mrf.mxu0
    %239 = vmatprep.mubr.bf16.mxu0 0
    %240 = vmatmul.mubr.bf16.gmra.mxu0 %v122
    %v241 = vpop.f32.mrf.mxu0
    %v242 = vadd.f32 %v85, %v241
    %v243 = vpop.f32.mrf.mxu0
    %v244 = vpop.f32.mrf.mxu0
    %v245 = vadd.f32 %v85, %v244
    %v246 = vpop.f32.mrf.mxu0
    %247 = vmatprep.mubr.bf16.mxu0 0
    %248 = vmatmul.mubr.bf16.gmra.mxu0 %v123
    %v249 = vpop.f32.mrf.mxu0
    %v250 = vadd.f32 %v85, %v249
    %v251 = vpop.f32.mrf.mxu0
    %v252 = vpop.f32.mrf.mxu0
    %v253 = vadd.f32 %v85, %v252
    %v254 = vpop.f32.mrf.mxu0
    %255 = vmatprep.mubr.bf16.mxu0 0
    %256 = vmatmul.mubr.bf16.gmra.mxu0 %v124
    %v257 = vpop.f32.mrf.mxu0
    %v258 = vadd.f32 %v85, %v257
    %v259 = vpop.f32.mrf.mxu0
    %v260 = vpop.f32.mrf.mxu0
    %v261 = vadd.f32 %v85, %v260
    %v262 = vpop.f32.mrf.mxu0
    %263 = vmatprep.mubr.bf16.mxu0 0
    %264 = vmatmul.mubr.bf16.gmra.mxu0 %v125
    %v265 = vpop.f32.mrf.mxu0
    %v266 = vadd.f32 %v85, %v265
    %v267 = vpop.f32.mrf.mxu0
    %v268 = vpop.f32.mrf.mxu0
    %v269 = vadd.f32 %v85, %v268
    %v270 = vpop.f32.mrf.mxu0
    %271 = vmatprep.mubr.bf16.mxu0 0
    %272 = vmatmul.mubr.bf16.gmra.mxu0 %v126
    %v273 = vpop.f32.mrf.mxu0
    %v274 = vadd.f32 %v85, %v273
    %v275 = vpop.f32.mrf.mxu0
    %v276 = vpop.f32.mrf.mxu0
    %v277 = vadd.f32 %v85, %v276
    %v278 = vpop.f32.mrf.mxu0
    %279 = vdwg.mxu0
    %v280 = vmax.f32 %v218, 0.0
    %v281 = vmax.f32 %v221, 0.0
    %v282 = vmax.f32 %v226, 0.0
    %v283 = vmax.f32 %v229, 0.0
    %v284 = vmax.f32 %v234, 0.0
    %v285 = vmax.f32 %v237, 0.0
    %v286 = vmax.f32 %v242, 0.0
    %v287 = vmax.f32 %v245, 0.0
    %v288 = vmax.f32 %v250, 0.0
    %v289 = vmax.f32 %v253, 0.0
    %v290 = vmax.f32 %v258, 0.0
    %v291 = vmax.f32 %v261, 0.0
    %v292 = vmax.f32 %v266, 0.0
    %v293 = vmax.f32 %v269, 0.0
    %v294 = vmax.f32 %v274, 0.0
    %v295 = vmax.f32 %v277, 0.0
    %v296 = vpack.c.bf16 %v281, %v280
    %v297 = vpack.c.bf16 %v283, %v282
    %v298 = vpack.c.bf16 %v285, %v284
    %v299 = vpack.c.bf16 %v287, %v286
    %v300 = vpack.c.bf16 %v289, %v288
    %v301 = vpack.c.bf16 %v291, %v290
    %v302 = vpack.c.bf16 %v293, %v292
    %v303 = vpack.c.bf16 %v295, %v294
    %v312 = vunpack.c.l.b16 %v296
    %v313 = vunpack.c.h.b16 %v296
    %v314 = vunpack.c.l.b16 %v297
    %v315 = vunpack.c.h.b16 %v297
    %v316 = vunpack.c.l.b16 %v298
    %v317 = vunpack.c.h.b16 %v298
    %v318 = vunpack.c.l.b16 %v299
    %v319 = vunpack.c.h.b16 %v299
    %v320 = vunpack.c.l.b16 %v300
    %v321 = vunpack.c.h.b16 %v300
    %v322 = vunpack.c.l.b16 %v301
    %v323 = vunpack.c.h.b16 %v301
    %v324 = vunpack.c.l.b16 %v302
    %v325 = vunpack.c.h.b16 %v302
    %v326 = vunpack.c.l.b16 %v303
    %v327 = vunpack.c.h.b16 %v303
    %v328 = vpack.c.b16 %v312, %v312
    %v329 = vpack.c.b16 %v313, %v313
    %v330 = vpack.c.b16 %v314, %v314
    %v331 = vpack.c.b16 %v315, %v315
    %v332 = vpack.c.b16 %v316, %v316
    %v333 = vpack.c.b16 %v317, %v317
    %v334 = vpack.c.b16 %v318, %v318
    %v335 = vpack.c.b16 %v319, %v319
    %v336 = vpack.c.b16 %v320, %v320
    %v337 = vpack.c.b16 %v321, %v321
    %v338 = vpack.c.b16 %v322, %v322
    %v339 = vpack.c.b16 %v323, %v323
    %v340 = vpack.c.b16 %v324, %v324
    %v341 = vpack.c.b16 %v325, %v325
    %v342 = vpack.c.b16 %v326, %v326
    %v343 = vpack.c.b16 %v327, %v327
    %360 = vst [vmem:[#allocation9] sm:$0xf] %v328
    %361 = vst [vmem:[#allocation9 + $0x4] sm:$0xf] %v329
    %362 = vst [vmem:[#allocation9 + $0x8] sm:$0xf] %v330
    %363 = vst [vmem:[#allocation9 + $0xc] sm:$0xf] %v331
    %364 = vst [vmem:[#allocation9 + $0x10] sm:$0xf] %v332
    %365 = vst [vmem:[#allocation9 + $0x14] sm:$0xf] %v333
    %366 = vst [vmem:[#allocation9 + $0x18] sm:$0xf] %v334
    %367 = vst [vmem:[#allocation9 + $0x1c] sm:$0xf] %v335
    %368 = vst [vmem:[#allocation9 + $0x20] sm:$0xf] %v336
    %369 = vst [vmem:[#allocation9 + $0x24] sm:$0xf] %v337
    %370 = vst [vmem:[#allocation9 + $0x28] sm:$0xf] %v338
    %371 = vst [vmem:[#allocation9 + $0x2c] sm:$0xf] %v339
    %372 = vst [vmem:[#allocation9 + $0x30] sm:$0xf] %v340
    %373 = vst [vmem:[#allocation9 + $0x34] sm:$0xf] %v341
    %374 = vst [vmem:[#allocation9 + $0x38] sm:$0xf] %v342
    %375 = vst [vmem:[#allocation9 + $0x3c] sm:$0xf] %v343
    %v376 = vadd.f32 %v280, %v281
    %v377 = vadd.f32 %v376, %v282
    %v378 = vadd.f32 %v377, %v283
    %v379 = vadd.f32 %v378, %v284
    %v380 = vadd.f32 %v379, %v285
    %v381 = vadd.f32 %v380, %v286
    %v382 = vadd.f32 %v381, %v287
    %v383 = vadd.f32 %v382, %v288
    %v384 = vadd.f32 %v383, %v289
    %v385 = vadd.f32 %v384, %v290
    %v386 = vadd.f32 %v385, %v291
    %v387 = vadd.f32 %v386, %v292
    %v388 = vadd.f32 %v387, %v293
    %v389 = vadd.f32 %v388, %v294
    %v390 = vadd.f32 %v389, %v295
    %v391 = vrot.slane %v390, 4
    %v392 = vadd.f32 %v390, %v391
    %v393 = vrot.slane %v392, 2
    %v394 = vadd.f32 %v392, %v393
    %v395 = vrot.slane %v394, 1
    %v396 = vadd.f32 %v394, %v395
    %v397 = vmul.f32 %v280, %v280
    %v398 = vmul.f32 %v281, %v281
    %v399 = vmul.f32 %v282, %v282
    %v400 = vmul.f32 %v283, %v283
    %v401 = vmul.f32 %v284, %v284
    %v402 = vmul.f32 %v285, %v285
    %v403 = vmul.f32 %v286, %v286
    %v404 = vmul.f32 %v287, %v287
    %v405 = vmul.f32 %v288, %v288
    %v406 = vmul.f32 %v289, %v289
    %v407 = vmul.f32 %v290, %v290
    %v408 = vmul.f32 %v291, %v291
    %v409 = vmul.f32 %v292, %v292
    %v410 = vmul.f32 %v293, %v293
    %v411 = vmul.f32 %v294, %v294
    %v412 = vmul.f32 %v295, %v295
    %v413 = vadd.f32 %v397, %v398
    %v414 = vadd.f32 %v413, %v399
    %v415 = vadd.f32 %v414, %v400
    %v416 = vadd.f32 %v415, %v401
    %v417 = vadd.f32 %v416, %v402
    %v418 = vadd.f32 %v417, %v403
    %v419 = vadd.f32 %v418, %v404
    %v420 = vadd.f32 %v419, %v405
    %v421 = vadd.f32 %v420, %v406
    %v422 = vadd.f32 %v421, %v407
    %v423 = vadd.f32 %v422, %v408
    %v424 = vadd.f32 %v423, %v409
    %v425 = vadd.f32 %v424, %v410
    %v426 = vadd.f32 %v425, %v411
    %v427 = vadd.f32 %v426, %v412
    %v428 = vrot.slane %v427, 4
    %v429 = vadd.f32 %v427, %v428
    %v430 = vrot.slane %v429, 2
    %v431 = vadd.f32 %v429, %v430
    %v432 = vrot.slane %v431, 1
    %v433 = vadd.f32 %v431, %v432
    %p434 = scmp.eq.s32.totalorder 0, 0
    // Predicated region
    $region22: #{tpu_custom_call.1} parent=1 // pred_check
      %p435 = pneg %p434
    $region23: #{tpu_custom_call.1} parent=1 // pred_check_branch
      %437 = sbr.rel (%p435) target = $region25
    $region24: #{tpu_custom_call.1} parent=1 // pred_region
      %438 = vst [vmem:[#allocation2] sm:$0x1] 0.0
      %439 = vst [vmem:[#allocation3] sm:$0x1] 0.0
    $region25: #{tpu_custom_call.1} parent=1 // pred_fallthru
      _
    %v440 = vld [vmem:[#allocation2] sm:$0x1]
    %v441 = vadd.f32 %v440, %v396
    %442 = vst [vmem:[#allocation2] sm:$0x1] %v441
    %v443 = vld [vmem:[#allocation3] sm:$0x1]
    %v444 = vadd.f32 %v443, %v433
    %445 = vst [vmem:[#allocation3] sm:$0x1] %v444
    // Predicated region
    $region26: #{tpu_custom_call.1} parent=1 // pred_check
      %p446 = pneg %p434
    $region27: #{tpu_custom_call.1} parent=1 // pred_check_branch
      %448 = sbr.rel (%p446) target = $region29
    $region28: #{tpu_custom_call.1} parent=1 // pred_region
      %v449 = vld [vmem:[#allocation2] sm:$0x1]
      %450 = vst [vmem:[#allocation10] sm:$0x1] %v449
      %v451 = vld [vmem:[#allocation3] sm:$0x1]
      %452 = vst [vmem:[#allocation12] sm:$0x1] %v451
    $region29: #{tpu_custom_call.1} parent=1 // pred_fallthru
      _
    // Predicated region
    $region30: #{tpu_custom_call.1} parent=1 // pred_check
      _
    $region31: #{tpu_custom_call.1} parent=1 // pred_check_branch
      %454 = sbr.rel (0) target = $region33
    $region32: #{tpu_custom_call.1} parent=1 // pred_region
      %s456 = ssub.s32 1024, 1024
      %457 = vsyncadd [#allocation6], %s456
      %s458 = sshll.u32 [#allocation9], 4
      %s459 = int_to_ptr.vmem [resolvable:$true] %s458
      %464 = dma.vmem_to_hbm [thread:$0]  %s459, 1024, %s3, [#allocation6], 64, 64, 4
    $region33: #{tpu_custom_call.1} parent=1 // pred_fallthru
      _
    // Predicated region
    $region34: #{tpu_custom_call.1} parent=1 // pred_check
      _
    $region35: #{tpu_custom_call.1} parent=1 // pred_check_branch
      %466 = sbr.rel (0) target = $region37
    $region36: #{tpu_custom_call.1} parent=1 // pred_region
      %s468 = ssub.s32 16, 16
      %469 = vsyncadd [#allocation11], %s468
      %s471 = sshll.u32 [#allocation10], 4
      %s472 = int_to_ptr.vmem [resolvable:$true] %s471
      %474 = dma.vmem_to_hbm [thread:$0]  %s472, 16, %s4, [#allocation11]
    $region37: #{tpu_custom_call.1} parent=1 // pred_fallthru
      _
    // Predicated region
    $region38: #{tpu_custom_call.1} parent=1 // pred_check
      _
    $region39: #{tpu_custom_call.1} parent=1 // pred_check_branch
      %476 = sbr.rel (0) target = $region41
    $region40: #{tpu_custom_call.1} parent=1 // pred_region
      %s478 = ssub.s32 16, 16
      %479 = vsyncadd [#allocation11], %s478
      %s481 = sshll.u32 [#allocation12], 4
      %s482 = int_to_ptr.vmem [resolvable:$true] %s481
      %484 = dma.vmem_to_hbm [thread:$0]  %s482, 16, %s5, [#allocation11]
    $region41: #{tpu_custom_call.1} parent=1 // pred_fallthru
      _
    // Predicated region
    $region42: #{tpu_custom_call.1} parent=1 // pred_check
      _
    $region43: #{tpu_custom_call.1} parent=1 // pred_check_branch
      %486 = sbr.rel (0) target = $region45
    $region44: #{tpu_custom_call.1} parent=1 // pred_region
      %487 = dma.done [#allocation6], 1024
    $region45: #{tpu_custom_call.1} parent=1 // pred_fallthru
      _
    // Predicated region
    $region46: #{tpu_custom_call.1} parent=1 // pred_check
      _
    $region47: #{tpu_custom_call.1} parent=1 // pred_check_branch
      %489 = sbr.rel (0) target = $region49
    $region48: #{tpu_custom_call.1} parent=1 // pred_region
      %490 = dma.done [#allocation11], 16
    $region49: #{tpu_custom_call.1} parent=1 // pred_fallthru
      _
    // Predicated region
    $region50: #{tpu_custom_call.1} parent=1 // pred_check
      _
    $region51: #{tpu_custom_call.1} parent=1 // pred_check_branch
      %492 = sbr.rel (0) target = $region53
    $region52: #{tpu_custom_call.1} parent=1 // pred_region
      %493 = dma.done [#allocation11], 16
    $region53: #{tpu_custom_call.1} parent=1 // pred_fallthru
      _
    %494 = vsyncpa [#allocation5], 1
    %495 = vsyncpa [#allocation8], 1
    %496 = vsyncpa [#allocation6], 1
    %497 = vsyncpa [#allocation11], 1

</llo_original>
